<compile_context>
chip_gen: v7x
topology: tpu7x:2x2x1
jax: 0.10.0
libtpu: 0.0.40
codegen_flags: <defaults>
</compile_context>

<pallas_src>
import functools

import jax
import jax.numpy as jnp
from jax.experimental import pallas as pl
from jax.experimental.pallas import tpu as pltpu

HIDDEN1 = 128   # first hidden layer width (== lane width)
HIDDEN2 = 64    # second hidden layer width (lane-padded to 128 in-kernel)
LANES = 128
MAX_TB = 4096   # per-step batch-tile cap: in+out tiles stay << VMEM on all gens


def _round_up(x, m):
    return ((x + m - 1) // m) * m


def _f32_rows(state_dim):
    # rows: [0,S) = W1, S = b1, S+1 = b2 (lane-padded), S+2 = b3 (lane-padded);
    # sublane-pad the row count to a multiple of 8.
    return _round_up(state_dim + 3, 8)


def _num_tensorcores():
    """Best-effort detection of TensorCores per chip (2 on v7x / megacore parts)."""
    try:
        kind = jax.devices()[0].device_kind.lower()
    except Exception:
        return 1
    for tag in ("v7", "7x", "v4", "v5p"):
        if tag in kind:
            return 2
    return 1


def _pick_tiling(batch, n_cores):
    """Pick (tb, steps, b_pad).

    Single-TC (v5e/v6e): one big tile -> grid of 1 (amortizes per-step overhead).
    Dual-TC (v7x): an even number of steps so 'parallel' sharding keeps both
    TensorCores busy.  tb capped at MAX_TB so VMEM never becomes a concern.
    """
    b8 = _round_up(max(batch, 1), 8)
    if n_cores >= 2 and b8 >= 8 * n_cores:
        tb = min(_round_up(pl.cdiv(b8, n_cores), 8), MAX_TB)
        steps = _round_up(pl.cdiv(b8, tb), n_cores)     # balanced per-TC work
    else:
        steps = pl.cdiv(b8, MAX_TB)
        tb = _round_up(pl.cdiv(b8, steps), 8)
        steps = pl.cdiv(b8, tb)
    return tb, steps, steps * tb


# ---------------------------------------------------------------------------
# Parameter packing
#   pf32  : [round_up(S+3,8), 128] f32   rows [0,S)=W1, S=b1, S+1=b2, S+2=b3
#   pbf16 : [256, 128]            bf16   rows [0,128)=W2 (lanes [0,64) valid),
#                                        rows [128,192)=W3 (lanes [0,A) valid)
# Zero padding everywhere else flows through the MLP as exact zeros.
# ---------------------------------------------------------------------------
def pack_params(params, state_dim, action_dim):
    assert HIDDEN2 <= LANES, "HIDDEN2 must fit in one 128-lane tile"
    assert action_dim <= LANES, "action_dim must fit in one 128-lane tile"
    assert params["w1"].shape == (state_dim, HIDDEN1)
    assert params["w2"].shape == (HIDDEN1, HIDDEN2)
    assert params["w3"].shape == (HIDDEN2, action_dim)

    rows_f = _f32_rows(state_dim)
    pf = jnp.zeros((rows_f, LANES), jnp.float32)
    pf = pf.at[0:state_dim, :].set(params["w1"].astype(jnp.float32))
    pf = pf.at[state_dim, :].set(params["b1"].reshape(-1).astype(jnp.float32))
    pf = pf.at[state_dim + 1, 0:HIDDEN2].set(params["b2"].reshape(-1).astype(jnp.float32))
    pf = pf.at[state_dim + 2, 0:action_dim].set(params["b3"].reshape(-1).astype(jnp.float32))

    pw = jnp.zeros((2 * HIDDEN1, LANES), jnp.bfloat16)
    pw = pw.at[0:HIDDEN1, 0:HIDDEN2].set(params["w2"].astype(jnp.bfloat16))
    pw = pw.at[HIDDEN1:HIDDEN1 + HIDDEN2, 0:action_dim].set(params["w3"].astype(jnp.bfloat16))
    return pf, pw


# ---------------------------------------------------------------------------
# Kernel: one batch tile [TB, S] -> [TB, 128] Q-values (lanes >= A are zero).
# ---------------------------------------------------------------------------
def _mlp_kernel(x_ref, pf_ref, pw_ref, o_ref, *, state_dim):
    x = x_ref[...]                                           # [TB, S] f32

    # Layer 1: Linear(S, 128) + ReLU.  K = S is tiny (3), so skip the MXU and
    # do S unrolled VPU FMAs in f32: h1 = b1 + sum_k x[:, k] * W1[k, :].
    h1 = x[:, 0:1] * pf_ref[0:1, :] + pf_ref[state_dim:state_dim + 1, :]
    for k in range(1, state_dim):
        h1 = h1 + x[:, k:k + 1] * pf_ref[k:k + 1, :]
    h1 = jnp.maximum(h1, 0.0)                                # [TB, 128] f32

    # Layer 2: Linear(128, 64) + ReLU.  bf16 MXU matmul, f32 accumulation.
    # Padded lanes [64,128) of W2/b2 are zero, so they stay exactly zero.
    h2 = jnp.dot(h1.astype(jnp.bfloat16), pw_ref[0:HIDDEN1, :],
                 preferred_element_type=jnp.float32)
    h2 = jnp.maximum(h2 + pf_ref[state_dim + 1:state_dim + 2, :], 0.0)

    # Layer 3: Linear(64, A).  bf16 MXU matmul, f32 accumulation.  W3 rows
    # >= 64 and lanes >= A are zero, so padded output lanes are exactly zero.
    q = jnp.dot(h2.astype(jnp.bfloat16), pw_ref[HIDDEN1:2 * HIDDEN1, :],
                preferred_element_type=jnp.float32)
    o_ref[...] = (q + pf_ref[state_dim + 2:state_dim + 3, :]).astype(o_ref.dtype)


def dqn_pendulum_forward(x, packed_params, *, state_dim, action_dim, tb=None):
    """DQN MLP forward in one Pallas TPU kernel.

    x: [B, state_dim] float32
    packed_params: (pf32, pbf16) from pack_params()
    returns: [B, action_dim] float32 Q-values
    """
    pf32, pbf16 = packed_params
    B = x.shape[0]
    rows_f = pf32.shape[0]

    if tb is None:
        tb, steps, b_pad = _pick_tiling(B, _num_tensorcores())
    else:
        steps = pl.cdiv(B, tb)
        b_pad = steps * tb
    if b_pad != B:
        # No-op when B is already a multiple of tb (preferred for perf).
        x = jnp.pad(x, ((0, b_pad - B), (0, 0)))

    flops = 2 * b_pad * (state_dim * HIDDEN1 + HIDDEN1 * HIDDEN2 + HIDDEN2 * action_dim)
    bytes_accessed = (b_pad * state_dim * 4          # x
                      + rows_f * LANES * 4           # f32 params
                      + 2 * HIDDEN1 * LANES * 2      # bf16 weights
                      + b_pad * LANES * 4)           # output slab

    out = pl.pallas_call(
        functools.partial(_mlp_kernel, state_dim=state_dim),
        out_shape=jax.ShapeDtypeStruct((b_pad, LANES), jnp.float32),
        grid=(steps,),
        in_specs=[
            pl.BlockSpec((tb, state_dim), lambda i: (i, 0)),       # batch tile
            pl.BlockSpec((rows_f, LANES), lambda i: (0, 0)),       # resident f32 params
            pl.BlockSpec((2 * HIDDEN1, LANES), lambda i: (0, 0)),  # resident bf16 weights
        ],
        out_specs=pl.BlockSpec((tb, LANES), lambda i: (i, 0)),
        compiler_params=pltpu.CompilerParams(
            dimension_semantics=("parallel",)),
        cost_estimate=pl.CostEstimate(
            flops=flops, transcendentals=0, bytes_accessed=bytes_accessed),
    )(x, pf32, pbf16)

    # TODO(synk): for action selection, fuse the masked argmax over the first
    # `action_dim` lanes into the kernel epilogue instead of this XLA slice.
    return out[:B, :action_dim]


# ---------------------------------------------------------------------------
# Init + pure-JAX references
# ---------------------------------------------------------------------------
def init_params(key, state_dim, action_dim):
    """Kaiming-uniform-ish init like nn.Linear defaults (weights stored [in, out])."""
    def linear_init(k, fan_in, fan_out):
        kw, kb = jax.random.split(k)
        bound = 1.0 / jnp.sqrt(jnp.float32(fan_in))
        w = jax.random.uniform(kw, (fan_in, fan_out), jnp.float32, -bound, bound)
        b = jax.random.uniform(kb, (1, fan_out), jnp.float32, -bound, bound)
        return w, b

    k1, k2, k3 = jax.random.split(key, 3)
    w1, b1 = linear_init(k1, state_dim, HIDDEN1)
    w2, b2 = linear_init(k2, HIDDEN1, HIDDEN2)
    w3, b3 = linear_init(k3, HIDDEN2, action_dim)
    return dict(w1=w1, b1=b1, w2=w2, b2=b2, w3=w3, b3=b3)


def reference_forward(x, p):
    h1 = jnp.maximum(x @ p["w1"] + p["b1"], 0.0)
    h2 = jnp.maximum(h1 @ p["w2"] + p["b2"], 0.0)
    return h2 @ p["w3"] + p["b3"]


def reference_forward_bf16(x, p):
    """Matches the kernel's numerics: bf16 MXU matmuls, f32 accumulation."""
    h1 = jnp.maximum(x @ p["w1"] + p["b1"], 0.0)
    h2 = jnp.dot(h1.astype(jnp.bfloat16), p["w2"].astype(jnp.bfloat16),
                 preferred_element_type=jnp.float32)
    h2 = jnp.maximum(h2 + p["b2"], 0.0)
    q = jnp.dot(h2.astype(jnp.bfloat16), p["w3"].astype(jnp.bfloat16),
                preferred_element_type=jnp.float32)
    return q + p["b3"]


if __name__ == "__main__":
    # Pendulum-like setup: 3-dim state (cos theta, sin theta, theta_dot),
    # 5 discretized torque actions.  BATCH=256 is a multiple of every tile the
    # tiler can pick (256 on single-TC, 128x2 on dual-TC), so the pad is a no-op.
    STATE_DIM = 3
    ACTION_DIM = 5
    BATCH = 256

    key = jax.random.PRNGKey(0)
    kx, kp = jax.random.split(key)

    x = jax.random.normal(kx, (BATCH, STATE_DIM), dtype=jnp.float32)
    params = init_params(kp, STATE_DIM, ACTION_DIM)
    packed = pack_params(params, STATE_DIM, ACTION_DIM)

    q = dqn_pendulum_forward(x, packed, state_dim=STATE_DIM, action_dim=ACTION_DIM)
    q = jax.block_until_ready(q)
    assert q.shape == (BATCH, ACTION_DIM)

    # Tight check against a reference that matches the kernel's bf16 matmul
    # numerics, plus a loose check against the pure-f32 module semantics.
    q_bf16_ref = reference_forward_bf16(x, params)
    q_f32_ref = reference_forward(x, params)
    assert jnp.allclose(q, q_bf16_ref, atol=5e-3, rtol=5e-3), "mismatch vs bf16-matched reference"
    assert jnp.allclose(q, q_f32_ref, atol=5e-2, rtol=5e-2), "mismatch vs f32 reference"

    print("KERNEL_OK")
</pallas_src>

<mosaic_0001>
module attributes {stable_mosaic.version = 11 : i64} {
  func.func @_mlp_kernel(%arg0: i32, %arg1: memref<256x3xf32, #tpu.memory_space<vmem>>, %arg2: memref<8x128xf32, #tpu.memory_space<vmem>>, %arg3: memref<256x128xbf16, #tpu.memory_space<vmem>>, %arg4: memref<256x128xf32, #tpu.memory_space<vmem>>) attributes {dimension_semantics = [#tpu.dimension_semantics<parallel>], iteration_bounds = array<i64: 1>, scalar_prefetch = 0 : i64, scratch_operands = 0 : i64, tpu.core_type = #tpu.core_type<tc>, window_params = [{transform_indices = @transform_0, window_bounds = array<i64: 256, 3>}, {pipeline_mode = #tpu.pipeline_mode<synchronous>, transform_indices = @transform_1, window_bounds = array<i64: 8, 128>}, {pipeline_mode = #tpu.pipeline_mode<synchronous>, transform_indices = @transform_2, window_bounds = array<i64: 256, 128>}, {transform_indices = @transform_3, window_bounds = array<i64: 256, 128>}]} {
    %c0 = arith.constant 0 : index
    %c0_0 = arith.constant 0 : index
    %0 = vector.load %arg1[%c0, %c0_0] : memref<256x3xf32, #tpu.memory_space<vmem>>, vector<256x3xf32>
    %1 = vector.extract_strided_slice %0 {offsets = [0, 0], sizes = [256, 1], strides = [1, 1]} : vector<256x3xf32> to vector<256x1xf32>
    %c0_1 = arith.constant 0 : index
    %c0_2 = arith.constant 0 : index
    %2 = vector.load %arg2[%c0_1, %c0_2] : memref<8x128xf32, #tpu.memory_space<vmem>>, vector<1x128xf32>
    %3 = vector.broadcast %1 : vector<256x1xf32> to vector<256x128xf32>
    %4 = vector.broadcast %2 : vector<1x128xf32> to vector<256x128xf32>
    %5 = arith.mulf %3, %4 : vector<256x128xf32>
    %c3 = arith.constant 3 : index
    %c0_3 = arith.constant 0 : index
    %6 = vector.load %arg2[%c3, %c0_3] : memref<8x128xf32, #tpu.memory_space<vmem>>, vector<1x128xf32>
    %7 = vector.broadcast %6 : vector<1x128xf32> to vector<256x128xf32>
    %8 = arith.addf %5, %7 : vector<256x128xf32>
    %9 = vector.extract_strided_slice %0 {offsets = [0, 1], sizes = [256, 1], strides = [1, 1]} : vector<256x3xf32> to vector<256x1xf32>
    %c1 = arith.constant 1 : index
    %c0_4 = arith.constant 0 : index
    %10 = vector.load %arg2[%c1, %c0_4] : memref<8x128xf32, #tpu.memory_space<vmem>>, vector<1x128xf32>
    %11 = vector.broadcast %9 : vector<256x1xf32> to vector<256x128xf32>
    %12 = vector.broadcast %10 : vector<1x128xf32> to vector<256x128xf32>
    %13 = arith.mulf %11, %12 : vector<256x128xf32>
    %14 = arith.addf %8, %13 : vector<256x128xf32>
    %15 = vector.extract_strided_slice %0 {offsets = [0, 2], sizes = [256, 1], strides = [1, 1]} : vector<256x3xf32> to vector<256x1xf32>
    %c2 = arith.constant 2 : index
    %c0_5 = arith.constant 0 : index
    %16 = vector.load %arg2[%c2, %c0_5] : memref<8x128xf32, #tpu.memory_space<vmem>>, vector<1x128xf32>
    %17 = vector.broadcast %15 : vector<256x1xf32> to vector<256x128xf32>
    %18 = vector.broadcast %16 : vector<1x128xf32> to vector<256x128xf32>
    %19 = arith.mulf %17, %18 : vector<256x128xf32>
    %20 = arith.addf %14, %19 : vector<256x128xf32>
    %cst = arith.constant 0.000000e+00 : f32
    %21 = vector.broadcast %cst : f32 to vector<256x128xf32>
    %22 = arith.maximumf %20, %21 : vector<256x128xf32>
    %23 = arith.truncf %22 : vector<256x128xf32> to vector<256x128xbf16>
    %c0_6 = arith.constant 0 : index
    %c0_7 = arith.constant 0 : index
    %24 = vector.load %arg3[%c0_6, %c0_7] : memref<256x128xbf16, #tpu.memory_space<vmem>>, vector<128x128xbf16>
    %cst_8 = arith.constant dense<0.000000e+00> : vector<256x128xf32>
    %25 = tpu.matmul %23, %24, %cst_8 {dimension_numbers = #tpu.dot_dimension_numbers<[1], [0], [0], [1], [0, 0, 1, 1], [], []>} : vector<256x128xbf16>, vector<128x128xbf16>, vector<256x128xf32> -> vector<256x128xf32>
    %c4 = arith.constant 4 : index
    %c0_9 = arith.constant 0 : index
    %26 = vector.load %arg2[%c4, %c0_9] : memref<8x128xf32, #tpu.memory_space<vmem>>, vector<1x128xf32>
    %27 = vector.broadcast %26 : vector<1x128xf32> to vector<256x128xf32>
    %28 = arith.addf %25, %27 : vector<256x128xf32>
    %cst_10 = arith.constant 0.000000e+00 : f32
    %29 = vector.broadcast %cst_10 : f32 to vector<256x128xf32>
    %30 = arith.maximumf %28, %29 : vector<256x128xf32>
    %31 = arith.truncf %30 : vector<256x128xf32> to vector<256x128xbf16>
    %c128 = arith.constant 128 : index
    %c0_11 = arith.constant 0 : index
    %32 = vector.load %arg3[%c128, %c0_11] : memref<256x128xbf16, #tpu.memory_space<vmem>>, vector<128x128xbf16>
    %cst_12 = arith.constant dense<0.000000e+00> : vector<256x128xf32>
    %33 = tpu.matmul %31, %32, %cst_12 {dimension_numbers = #tpu.dot_dimension_numbers<[1], [0], [0], [1], [0, 0, 1, 1], [], []>} : vector<256x128xbf16>, vector<128x128xbf16>, vector<256x128xf32> -> vector<256x128xf32>
    %c5 = arith.constant 5 : index
    %c0_13 = arith.constant 0 : index
    %34 = vector.load %arg2[%c5, %c0_13] : memref<8x128xf32, #tpu.memory_space<vmem>>, vector<1x128xf32>
    %35 = vector.broadcast %34 : vector<1x128xf32> to vector<256x128xf32>
    %36 = arith.addf %33, %35 : vector<256x128xf32>
    %c0_14 = arith.constant 0 : index
    %c0_15 = arith.constant 0 : index
    %37 = vector.load %arg4[%c0_14, %c0_15] : memref<256x128xf32, #tpu.memory_space<vmem>>, vector<256x128xf32>
    tpu.vector_store %arg4[%c0_14, %c0_15], %36 {strides = array<i32>} : memref<256x128xf32, #tpu.memory_space<vmem>>, vector<256x128xf32>,
    return
  }
  func.func @transform_0(%arg0: i32) -> (i32, i32) {
    %c0_i32 = arith.constant 0 : i32
    %c0_i32_0 = arith.constant 0 : i32
    return %arg0, %c0_i32 : i32, i32
  }
  func.func @transform_1(%arg0: i32) -> (i32, i32) {
    %c0_i32 = arith.constant 0 : i32
    %c0_i32_0 = arith.constant 0 : i32
    %c0_i32_1 = arith.constant 0 : i32
    return %c0_i32, %c0_i32_0 : i32, i32
  }
  func.func @transform_2(%arg0: i32) -> (i32, i32) {
    %c0_i32 = arith.constant 0 : i32
    %c0_i32_0 = arith.constant 0 : i32
    %c0_i32_1 = arith.constant 0 : i32
    return %c0_i32, %c0_i32_0 : i32, i32
  }
  func.func @transform_3(%arg0: i32) -> (i32, i32) {
    %c0_i32 = arith.constant 0 : i32
    %c0_i32_0 = arith.constant 0 : i32
    return %arg0, %c0_i32 : i32, i32
  }
}

</mosaic_0001>

<llo_original>
// kernel: tpu_custom_call.1
$region0: #{tpu_custom_call.1}
  #allocation0 [shape = 'u32[]', space=smem, size = 0x4, offset = 0x4, fixed_abs, tag = 'smem constant byte address 0x4 - core index']
  #allocation1 [shape = 'u32[144,128]{1,0:T(1,128)}', space=vmem, size = 0x12000, scoped, tag = 'internal scratch']
  %s0 = inlined_call_operand.vmem [shape: f32[256,3], index: 0, kind: input, shape index: {}]
  %s1 = inlined_call_operand.vmem [shape: f32[8,128], index: 1, kind: input, shape index: {}]
  %s2 = inlined_call_operand.vmem [shape: bf16[256,128], index: 2, kind: input, shape index: {}]
  %s3 = inlined_call_operand.hbm [shape: f32[256,128], index: 3, kind: output, shape index: {}]
  %s4 = sld [smem:[#allocation0]]
  $region22: #{tpu_custom_call.1} parent=0
    _
  %s6 = ssub.s32 1, %s4
  %s7 = scalar_select 0, %s6, %s4
  $region1: #{tpu_custom_call.1} parent=0
    #allocation2 [shape = 'u8[131072]{0}', space=vmem, size = 0x20000, scoped, tag = 'output window, operand 0, single buffered']
    #allocation3 [shape = 's32[1]{0}', space=sflag, size = 0x4, scoped, tag = 'scoped memory for tpu_custom_call.1']
    %8 = vsyncpa [#allocation3], 0
    // Predicated region
    $region2: #{tpu_custom_call.1} parent=1 // pred_check
      _
    $region3: #{tpu_custom_call.1} parent=1 // pred_check_branch
      %10 = sbr.rel (0) target = $region5
    $region4: #{tpu_custom_call.1} parent=1 // pred_region
      _
    $region5: #{tpu_custom_call.1} parent=1 // pred_fallthru
      _
    // Predicated region
    $region6: #{tpu_custom_call.1} parent=1 // pred_check
      _
    $region7: #{tpu_custom_call.1} parent=1 // pred_check_branch
      %12 = sbr.rel (0) target = $region9
    $region8: #{tpu_custom_call.1} parent=1 // pred_region
      _
    $region9: #{tpu_custom_call.1} parent=1 // pred_fallthru
      _
    // Predicated region
    $region10: #{tpu_custom_call.1} parent=1 // pred_check
      _
    $region11: #{tpu_custom_call.1} parent=1 // pred_check_branch
      %14 = sbr.rel (0) target = $region13
    $region12: #{tpu_custom_call.1} parent=1 // pred_region
      _
    $region13: #{tpu_custom_call.1} parent=1 // pred_fallthru
      _
    %v16 = vld [vmem:[%s0] sm:$0xff]
    %v17 = vld [vmem:[%s0 + $0x8] sm:$0xff]
    %v18 = vld [vmem:[%s0 + $0x10] sm:$0xff]
    %v19 = vld [vmem:[%s0 + $0x18] sm:$0xff]
    %v20 = vld [vmem:[%s0 + $0x20] sm:$0xff]
    %v21 = vld [vmem:[%s0 + $0x28] sm:$0xff]
    %v22 = vld [vmem:[%s0 + $0x30] sm:$0xff]
    %v23 = vld [vmem:[%s0 + $0x38] sm:$0xff]
    %v24 = vld [vmem:[%s0 + $0x40] sm:$0xff]
    %v25 = vld [vmem:[%s0 + $0x48] sm:$0xff]
    %v26 = vld [vmem:[%s0 + $0x50] sm:$0xff]
    %v27 = vld [vmem:[%s0 + $0x58] sm:$0xff]
    %v28 = vld [vmem:[%s0 + $0x60] sm:$0xff]
    %v29 = vld [vmem:[%s0 + $0x68] sm:$0xff]
    %v30 = vld [vmem:[%s0 + $0x70] sm:$0xff]
    %v31 = vld [vmem:[%s0 + $0x78] sm:$0xff]
    %v32 = vld [vmem:[%s0 + $0x80] sm:$0xff]
    %v33 = vld [vmem:[%s0 + $0x88] sm:$0xff]
    %v34 = vld [vmem:[%s0 + $0x90] sm:$0xff]
    %v35 = vld [vmem:[%s0 + $0x98] sm:$0xff]
    %v36 = vld [vmem:[%s0 + $0xa0] sm:$0xff]
    %v37 = vld [vmem:[%s0 + $0xa8] sm:$0xff]
    %v38 = vld [vmem:[%s0 + $0xb0] sm:$0xff]
    %v39 = vld [vmem:[%s0 + $0xb8] sm:$0xff]
    %v40 = vld [vmem:[%s0 + $0xc0] sm:$0xff]
    %v41 = vld [vmem:[%s0 + $0xc8] sm:$0xff]
    %v42 = vld [vmem:[%s0 + $0xd0] sm:$0xff]
    %v43 = vld [vmem:[%s0 + $0xd8] sm:$0xff]
    %v44 = vld [vmem:[%s0 + $0xe0] sm:$0xff]
    %v45 = vld [vmem:[%s0 + $0xe8] sm:$0xff]
    %v46 = vld [vmem:[%s0 + $0xf0] sm:$0xff]
    %v47 = vld [vmem:[%s0 + $0xf8] sm:$0xff]
    %v48 = vld [vmem:[%s1] sm:$0x1]
    %50 = vset.pattern.permute.xlu0 0
    %51 = vperm.xlu0 %50, %v16
    %v52 = vpop.permute.xlu0 %51
    %55 = vset.pattern.permute.xlu0 0
    %56 = vperm.xlu0 %55, %v17
    %v57 = vpop.permute.xlu0 %56
    %60 = vset.pattern.permute.xlu0 0
    %61 = vperm.xlu0 %60, %v18
    %v62 = vpop.permute.xlu0 %61
    %65 = vset.pattern.permute.xlu0 0
    %66 = vperm.xlu0 %65, %v19
    %v67 = vpop.permute.xlu0 %66
    %70 = vset.pattern.permute.xlu0 0
    %71 = vperm.xlu0 %70, %v20
    %v72 = vpop.permute.xlu0 %71
    %75 = vset.pattern.permute.xlu0 0
    %76 = vperm.xlu0 %75, %v21
    %v77 = vpop.permute.xlu0 %76
    %80 = vset.pattern.permute.xlu0 0
    %81 = vperm.xlu0 %80, %v22
    %v82 = vpop.permute.xlu0 %81
    %85 = vset.pattern.permute.xlu0 0
    %86 = vperm.xlu0 %85, %v23
    %v87 = vpop.permute.xlu0 %86
    %90 = vset.pattern.permute.xlu0 0
    %91 = vperm.xlu0 %90, %v24
    %v92 = vpop.permute.xlu0 %91
    %95 = vset.pattern.permute.xlu0 0
    %96 = vperm.xlu0 %95, %v25
    %v97 = vpop.permute.xlu0 %96
    %100 = vset.pattern.permute.xlu0 0
    %101 = vperm.xlu0 %100, %v26
    %v102 = vpop.permute.xlu0 %101
    %105 = vset.pattern.permute.xlu0 0
    %106 = vperm.xlu0 %105, %v27
    %v107 = vpop.permute.xlu0 %106
    %110 = vset.pattern.permute.xlu0 0
    %111 = vperm.xlu0 %110, %v28
    %v112 = vpop.permute.xlu0 %111
    %115 = vset.pattern.permute.xlu0 0
    %116 = vperm.xlu0 %115, %v29
    %v117 = vpop.permute.xlu0 %116
    %120 = vset.pattern.permute.xlu0 0
    %121 = vperm.xlu0 %120, %v30
    %v122 = vpop.permute.xlu0 %121
    %125 = vset.pattern.permute.xlu0 0
    %126 = vperm.xlu0 %125, %v31
    %v127 = vpop.permute.xlu0 %126
    %130 = vset.pattern.permute.xlu0 0
    %131 = vperm.xlu0 %130, %v32
    %v132 = vpop.permute.xlu0 %131
    %135 = vset.pattern.permute.xlu0 0
    %136 = vperm.xlu0 %135, %v33
    %v137 = vpop.permute.xlu0 %136
    %140 = vset.pattern.permute.xlu0 0
    %141 = vperm.xlu0 %140, %v34
    %v142 = vpop.permute.xlu0 %141
    %145 = vset.pattern.permute.xlu0 0
    %146 = vperm.xlu0 %145, %v35
    %v147 = vpop.permute.xlu0 %146
    %150 = vset.pattern.permute.xlu0 0
    %151 = vperm.xlu0 %150, %v36
    %v152 = vpop.permute.xlu0 %151
    %155 = vset.pattern.permute.xlu0 0
    %156 = vperm.xlu0 %155, %v37
    %v157 = vpop.permute.xlu0 %156
    %160 = vset.pattern.permute.xlu0 0
    %161 = vperm.xlu0 %160, %v38
    %v162 = vpop.permute.xlu0 %161
    %165 = vset.pattern.permute.xlu0 0
    %166 = vperm.xlu0 %165, %v39
    %v167 = vpop.permute.xlu0 %166
    %170 = vset.pattern.permute.xlu0 0
    %171 = vperm.xlu0 %170, %v40
    %v172 = vpop.permute.xlu0 %171
    %175 = vset.pattern.permute.xlu0 0
    %176 = vperm.xlu0 %175, %v41
    %v177 = vpop.permute.xlu0 %176
    %180 = vset.pattern.permute.xlu0 0
    %181 = vperm.xlu0 %180, %v42
    %v182 = vpop.permute.xlu0 %181
    %185 = vset.pattern.permute.xlu0 0
    %186 = vperm.xlu0 %185, %v43
    %v187 = vpop.permute.xlu0 %186
    %190 = vset.pattern.permute.xlu0 0
    %191 = vperm.xlu0 %190, %v44
    %v192 = vpop.permute.xlu0 %191
    %195 = vset.pattern.permute.xlu0 0
    %196 = vperm.xlu0 %195, %v45
    %v197 = vpop.permute.xlu0 %196
    %200 = vset.pattern.permute.xlu0 0
    %201 = vperm.xlu0 %200, %v46
    %v202 = vpop.permute.xlu0 %201
    %205 = vset.pattern.permute.xlu0 0
    %206 = vperm.xlu0 %205, %v47
    %v207 = vpop.permute.xlu0 %206
    %v209 = vlaneseq
    %v210 = vshrl.u32 %v209, 7
    %v211 = vsub.s32 0, %v210
    %v212 = vrot.slane %v48, %v211
    %v213 = vmul.f32 %v52, %v212
    %v214 = vmul.f32 %v57, %v212
    %v215 = vmul.f32 %v62, %v212
    %v216 = vmul.f32 %v67, %v212
    %v217 = vmul.f32 %v72, %v212
    %v218 = vmul.f32 %v77, %v212
    %v219 = vmul.f32 %v82, %v212
    %v220 = vmul.f32 %v87, %v212
    %v221 = vmul.f32 %v92, %v212
    %v222 = vmul.f32 %v97, %v212
    %v223 = vmul.f32 %v102, %v212
    %v224 = vmul.f32 %v107, %v212
    %v225 = vmul.f32 %v112, %v212
    %v226 = vmul.f32 %v117, %v212
    %v227 = vmul.f32 %v122, %v212
    %v228 = vmul.f32 %v127, %v212
    %v229 = vmul.f32 %v132, %v212
    %v230 = vmul.f32 %v137, %v212
    %v231 = vmul.f32 %v142, %v212
    %v232 = vmul.f32 %v147, %v212
    %v233 = vmul.f32 %v152, %v212
    %v234 = vmul.f32 %v157, %v212
    %v235 = vmul.f32 %v162, %v212
    %v236 = vmul.f32 %v167, %v212
    %v237 = vmul.f32 %v172, %v212
    %v238 = vmul.f32 %v177, %v212
    %v239 = vmul.f32 %v182, %v212
    %v240 = vmul.f32 %v187, %v212
    %v241 = vmul.f32 %v192, %v212
    %v242 = vmul.f32 %v197, %v212
    %v243 = vmul.f32 %v202, %v212
    %v244 = vmul.f32 %v207, %v212
    %v245 = vld [vmem:[%s1 + $0x3] sm:$0x1]
    %v246 = vlaneseq
    %v247 = vshrl.u32 %v246, 7
    %v248 = vsub.s32 0, %v247
    %v249 = vrot.slane %v245, %v248
    %v250 = vadd.f32 %v213, %v249
    %v251 = vadd.f32 %v214, %v249
    %v252 = vadd.f32 %v215, %v249
    %v253 = vadd.f32 %v216, %v249
    %v254 = vadd.f32 %v217, %v249
    %v255 = vadd.f32 %v218, %v249
    %v256 = vadd.f32 %v219, %v249
    %v257 = vadd.f32 %v220, %v249
    %v258 = vadd.f32 %v221, %v249
    %v259 = vadd.f32 %v222, %v249
    %v260 = vadd.f32 %v223, %v249
    %v261 = vadd.f32 %v224, %v249
    %v262 = vadd.f32 %v225, %v249
    %v263 = vadd.f32 %v226, %v249
    %v264 = vadd.f32 %v227, %v249
    %v265 = vadd.f32 %v228, %v249
    %v266 = vadd.f32 %v229, %v249
    %v267 = vadd.f32 %v230, %v249
    %v268 = vadd.f32 %v231, %v249
    %v269 = vadd.f32 %v232, %v249
    %v270 = vadd.f32 %v233, %v249
    %v271 = vadd.f32 %v234, %v249
    %v272 = vadd.f32 %v235, %v249
    %v273 = vadd.f32 %v236, %v249
    %v274 = vadd.f32 %v237, %v249
    %v275 = vadd.f32 %v238, %v249
    %v276 = vadd.f32 %v239, %v249
    %v277 = vadd.f32 %v240, %v249
    %v278 = vadd.f32 %v241, %v249
    %v279 = vadd.f32 %v242, %v249
    %v280 = vadd.f32 %v243, %v249
    %v281 = vadd.f32 %v244, %v249
    %v282 = vld [vmem:[%s1 + $0x1] sm:$0x1]
    %283 = vset.pattern.permute.xlu0 1
    %284 = vperm.xlu0 %283, %v16
    %v285 = vpop.permute.xlu0 %284
    %287 = vset.pattern.permute.xlu0 1
    %288 = vperm.xlu0 %287, %v17
    %v289 = vpop.permute.xlu0 %288
    %291 = vset.pattern.permute.xlu0 1
    %292 = vperm.xlu0 %291, %v18
    %v293 = vpop.permute.xlu0 %292
    %295 = vset.pattern.permute.xlu0 1
    %296 = vperm.xlu0 %295, %v19
    %v297 = vpop.permute.xlu0 %296
    %299 = vset.pattern.permute.xlu0 1
    %300 = vperm.xlu0 %299, %v20
    %v301 = vpop.permute.xlu0 %300
    %303 = vset.pattern.permute.xlu0 1
    %304 = vperm.xlu0 %303, %v21
    %v305 = vpop.permute.xlu0 %304
    %307 = vset.pattern.permute.xlu0 1
    %308 = vperm.xlu0 %307, %v22
    %v309 = vpop.permute.xlu0 %308
    %311 = vset.pattern.permute.xlu0 1
    %312 = vperm.xlu0 %311, %v23
    %v313 = vpop.permute.xlu0 %312
    %315 = vset.pattern.permute.xlu0 1
    %316 = vperm.xlu0 %315, %v24
    %v317 = vpop.permute.xlu0 %316
    %319 = vset.pattern.permute.xlu0 1
    %320 = vperm.xlu0 %319, %v25
    %v321 = vpop.permute.xlu0 %320
    %323 = vset.pattern.permute.xlu0 1
    %324 = vperm.xlu0 %323, %v26
    %v325 = vpop.permute.xlu0 %324
    %327 = vset.pattern.permute.xlu0 1
    %328 = vperm.xlu0 %327, %v27
    %v329 = vpop.permute.xlu0 %328
    %331 = vset.pattern.permute.xlu0 1
    %332 = vperm.xlu0 %331, %v28
    %v333 = vpop.permute.xlu0 %332
    %335 = vset.pattern.permute.xlu0 1
    %336 = vperm.xlu0 %335, %v29
    %v337 = vpop.permute.xlu0 %336
    %339 = vset.pattern.permute.xlu0 1
    %340 = vperm.xlu0 %339, %v30
    %v341 = vpop.permute.xlu0 %340
    %343 = vset.pattern.permute.xlu0 1
    %344 = vperm.xlu0 %343, %v31
    %v345 = vpop.permute.xlu0 %344
    %347 = vset.pattern.permute.xlu0 1
    %348 = vperm.xlu0 %347, %v32
    %v349 = vpop.permute.xlu0 %348
    %351 = vset.pattern.permute.xlu0 1
    %352 = vperm.xlu0 %351, %v33
    %v353 = vpop.permute.xlu0 %352
    %355 = vset.pattern.permute.xlu0 1
    %356 = vperm.xlu0 %355, %v34
    %v357 = vpop.permute.xlu0 %356
    %359 = vset.pattern.permute.xlu0 1
    %360 = vperm.xlu0 %359, %v35
    %v361 = vpop.permute.xlu0 %360
    %363 = vset.pattern.permute.xlu0 1
    %364 = vperm.xlu0 %363, %v36
    %v365 = vpop.permute.xlu0 %364
    %367 = vset.pattern.permute.xlu0 1
    %368 = vperm.xlu0 %367, %v37
    %v369 = vpop.permute.xlu0 %368
    %371 = vset.pattern.permute.xlu0 1
    %372 = vperm.xlu0 %371, %v38
    %v373 = vpop.permute.xlu0 %372
    %375 = vset.pattern.permute.xlu0 1
    %376 = vperm.xlu0 %375, %v39
    %v377 = vpop.permute.xlu0 %376
    %379 = vset.pattern.permute.xlu0 1
    %380 = vperm.xlu0 %379, %v40
    %v381 = vpop.permute.xlu0 %380
    %383 = vset.pattern.permute.xlu0 1
    %384 = vperm.xlu0 %383, %v41
    %v385 = vpop.permute.xlu0 %384
    %387 = vset.pattern.permute.xlu0 1
    %388 = vperm.xlu0 %387, %v42
    %v389 = vpop.permute.xlu0 %388
    %391 = vset.pattern.permute.xlu0 1
    %392 = vperm.xlu0 %391, %v43
    %v393 = vpop.permute.xlu0 %392
    %395 = vset.pattern.permute.xlu0 1
    %396 = vperm.xlu0 %395, %v44
    %v397 = vpop.permute.xlu0 %396
    %399 = vset.pattern.permute.xlu0 1
    %400 = vperm.xlu0 %399, %v45
    %v401 = vpop.permute.xlu0 %400
    %403 = vset.pattern.permute.xlu0 1
    %404 = vperm.xlu0 %403, %v46
    %v405 = vpop.permute.xlu0 %404
    %407 = vset.pattern.permute.xlu0 1
    %408 = vperm.xlu0 %407, %v47
    %v409 = vpop.permute.xlu0 %408
    %v411 = vlaneseq
    %v412 = vshrl.u32 %v411, 7
    %v413 = vsub.s32 0, %v412
    %v414 = vrot.slane %v282, %v413
    %v415 = vmul.f32 %v285, %v414
    %v416 = vmul.f32 %v289, %v414
    %v417 = vmul.f32 %v293, %v414
    %v418 = vmul.f32 %v297, %v414
    %v419 = vmul.f32 %v301, %v414
    %v420 = vmul.f32 %v305, %v414
    %v421 = vmul.f32 %v309, %v414
    %v422 = vmul.f32 %v313, %v414
    %v423 = vmul.f32 %v317, %v414
    %v424 = vmul.f32 %v321, %v414
    %v425 = vmul.f32 %v325, %v414
    %v426 = vmul.f32 %v329, %v414
    %v427 = vmul.f32 %v333, %v414
    %v428 = vmul.f32 %v337, %v414
    %v429 = vmul.f32 %v341, %v414
    %v430 = vmul.f32 %v345, %v414
    %v431 = vmul.f32 %v349, %v414
    %v432 = vmul.f32 %v353, %v414
    %v433 = vmul.f32 %v357, %v414
    %v434 = vmul.f32 %v361, %v414
    %v435 = vmul.f32 %v365, %v414
    %v436 = vmul.f32 %v369, %v414
    %v437 = vmul.f32 %v373, %v414
    %v438 = vmul.f32 %v377, %v414
    %v439 = vmul.f32 %v381, %v414
    %v440 = vmul.f32 %v385, %v414
    %v441 = vmul.f32 %v389, %v414
    %v442 = vmul.f32 %v393, %v414
    %v443 = vmul.f32 %v397, %v414
    %v444 = vmul.f32 %v401, %v414
    %v445 = vmul.f32 %v405, %v414
    %v446 = vmul.f32 %v409, %v414
    %v447 = vadd.f32 %v250, %v415
    %v448 = vadd.f32 %v251, %v416
    %v449 = vadd.f32 %v252, %v417
    %v450 = vadd.f32 %v253, %v418
    %v451 = vadd.f32 %v254, %v419
    %v452 = vadd.f32 %v255, %v420
    %v453 = vadd.f32 %v256, %v421
    %v454 = vadd.f32 %v257, %v422
    %v455 = vadd.f32 %v258, %v423
    %v456 = vadd.f32 %v259, %v424
    %v457 = vadd.f32 %v260, %v425
    %v458 = vadd.f32 %v261, %v426
    %v459 = vadd.f32 %v262, %v427
    %v460 = vadd.f32 %v263, %v428
    %v461 = vadd.f32 %v264, %v429
    %v462 = vadd.f32 %v265, %v430
    %v463 = vadd.f32 %v266, %v431
    %v464 = vadd.f32 %v267, %v432
    %v465 = vadd.f32 %v268, %v433
    %v466 = vadd.f32 %v269, %v434
    %v467 = vadd.f32 %v270, %v435
    %v468 = vadd.f32 %v271, %v436
    %v469 = vadd.f32 %v272, %v437
    %v470 = vadd.f32 %v273, %v438
    %v471 = vadd.f32 %v274, %v439
    %v472 = vadd.f32 %v275, %v440
    %v473 = vadd.f32 %v276, %v441
    %v474 = vadd.f32 %v277, %v442
    %v475 = vadd.f32 %v278, %v443
    %v476 = vadd.f32 %v279, %v444
    %v477 = vadd.f32 %v280, %v445
    %v478 = vadd.f32 %v281, %v446
    %v479 = vld [vmem:[%s1 + $0x2] sm:$0x1]
    %480 = vset.pattern.permute.xlu0 2
    %481 = vperm.xlu0 %480, %v16
    %v482 = vpop.permute.xlu0 %481
    %484 = vset.pattern.permute.xlu0 2
    %485 = vperm.xlu0 %484, %v17
    %v486 = vpop.permute.xlu0 %485
    %488 = vset.pattern.permute.xlu0 2
    %489 = vperm.xlu0 %488, %v18
    %v490 = vpop.permute.xlu0 %489
    %492 = vset.pattern.permute.xlu0 2
    %493 = vperm.xlu0 %492, %v19
    %v494 = vpop.permute.xlu0 %493
    %496 = vset.pattern.permute.xlu0 2
    %497 = vperm.xlu0 %496, %v20
    %v498 = vpop.permute.xlu0 %497
    %500 = vset.pattern.permute.xlu0 2
    %501 = vperm.xlu0 %500, %v21
    %v502 = vpop.permute.xlu0 %501
    %504 = vset.pattern.permute.xlu0 2
    %505 = vperm.xlu0 %504, %v22
    %v506 = vpop.permute.xlu0 %505
    %508 = vset.pattern.permute.xlu0 2
    %509 = vperm.xlu0 %508, %v23
    %v510 = vpop.permute.xlu0 %509
    %512 = vset.pattern.permute.xlu0 2
    %513 = vperm.xlu0 %512, %v24
    %v514 = vpop.permute.xlu0 %513
    %516 = vset.pattern.permute.xlu0 2
    %517 = vperm.xlu0 %516, %v25
    %v518 = vpop.permute.xlu0 %517
    %520 = vset.pattern.permute.xlu0 2
    %521 = vperm.xlu0 %520, %v26
    %v522 = vpop.permute.xlu0 %521
    %524 = vset.pattern.permute.xlu0 2
    %525 = vperm.xlu0 %524, %v27
    %v526 = vpop.permute.xlu0 %525
    %528 = vset.pattern.permute.xlu0 2
    %529 = vperm.xlu0 %528, %v28
    %v530 = vpop.permute.xlu0 %529
    %532 = vset.pattern.permute.xlu0 2
    %533 = vperm.xlu0 %532, %v29
    %v534 = vpop.permute.xlu0 %533
    %536 = vset.pattern.permute.xlu0 2
    %537 = vperm.xlu0 %536, %v30
    %v538 = vpop.permute.xlu0 %537
    %540 = vset.pattern.permute.xlu0 2
    %541 = vperm.xlu0 %540, %v31
    %v542 = vpop.permute.xlu0 %541
    %544 = vset.pattern.permute.xlu0 2
    %545 = vperm.xlu0 %544, %v32
    %v546 = vpop.permute.xlu0 %545
    %548 = vset.pattern.permute.xlu0 2
    %549 = vperm.xlu0 %548, %v33
    %v550 = vpop.permute.xlu0 %549
    %552 = vset.pattern.permute.xlu0 2
    %553 = vperm.xlu0 %552, %v34
    %v554 = vpop.permute.xlu0 %553
    %556 = vset.pattern.permute.xlu0 2
    %557 = vperm.xlu0 %556, %v35
    %v558 = vpop.permute.xlu0 %557
    %560 = vset.pattern.permute.xlu0 2
    %561 = vperm.xlu0 %560, %v36
    %v562 = vpop.permute.xlu0 %561
    %564 = vset.pattern.permute.xlu0 2
    %565 = vperm.xlu0 %564, %v37
    %v566 = vpop.permute.xlu0 %565
    %568 = vset.pattern.permute.xlu0 2
    %569 = vperm.xlu0 %568, %v38
    %v570 = vpop.permute.xlu0 %569
    %572 = vset.pattern.permute.xlu0 2
    %573 = vperm.xlu0 %572, %v39
    %v574 = vpop.permute.xlu0 %573
    %576 = vset.pattern.permute.xlu0 2
    %577 = vperm.xlu0 %576, %v40
    %v578 = vpop.permute.xlu0 %577
    %580 = vset.pattern.permute.xlu0 2
    %581 = vperm.xlu0 %580, %v41
    %v582 = vpop.permute.xlu0 %581
    %584 = vset.pattern.permute.xlu0 2
    %585 = vperm.xlu0 %584, %v42
    %v586 = vpop.permute.xlu0 %585
    %588 = vset.pattern.permute.xlu0 2
    %589 = vperm.xlu0 %588, %v43
    %v590 = vpop.permute.xlu0 %589
    %592 = vset.pattern.permute.xlu0 2
    %593 = vperm.xlu0 %592, %v44
    %v594 = vpop.permute.xlu0 %593
    %596 = vset.pattern.permute.xlu0 2
    %597 = vperm.xlu0 %596, %v45
    %v598 = vpop.permute.xlu0 %597
    %600 = vset.pattern.permute.xlu0 2
    %601 = vperm.xlu0 %600, %v46
    %v602 = vpop.permute.xlu0 %601
    %604 = vset.pattern.permute.xlu0 2
    %605 = vperm.xlu0 %604, %v47
    %v606 = vpop.permute.xlu0 %605
    %v608 = vlaneseq
    %v609 = vshrl.u32 %v608, 7
    %v610 = vsub.s32 0, %v609
    %v611 = vrot.slane %v479, %v610
    %v612 = vmul.f32 %v482, %v611
    %v613 = vmul.f32 %v486, %v611
    %v614 = vmul.f32 %v490, %v611
    %v615 = vmul.f32 %v494, %v611
    %v616 = vmul.f32 %v498, %v611
    %v617 = vmul.f32 %v502, %v611
    %v618 = vmul.f32 %v506, %v611
    %v619 = vmul.f32 %v510, %v611
    %v620 = vmul.f32 %v514, %v611
    %v621 = vmul.f32 %v518, %v611
    %v622 = vmul.f32 %v522, %v611
    %v623 = vmul.f32 %v526, %v611
    %v624 = vmul.f32 %v530, %v611
    %v625 = vmul.f32 %v534, %v611
    %v626 = vmul.f32 %v538, %v611
    %v627 = vmul.f32 %v542, %v611
    %v628 = vmul.f32 %v546, %v611
    %v629 = vmul.f32 %v550, %v611
    %v630 = vmul.f32 %v554, %v611
    %v631 = vmul.f32 %v558, %v611
    %v632 = vmul.f32 %v562, %v611
    %v633 = vmul.f32 %v566, %v611
    %v634 = vmul.f32 %v570, %v611
    %v635 = vmul.f32 %v574, %v611
    %v636 = vmul.f32 %v578, %v611
    %v637 = vmul.f32 %v582, %v611
    %v638 = vmul.f32 %v586, %v611
    %v639 = vmul.f32 %v590, %v611
    %v640 = vmul.f32 %v594, %v611
    %v641 = vmul.f32 %v598, %v611
    %v642 = vmul.f32 %v602, %v611
    %v643 = vmul.f32 %v606, %v611
    %v644 = vadd.f32 %v447, %v612
    %v645 = vadd.f32 %v448, %v613
    %v646 = vadd.f32 %v449, %v614
    %v647 = vadd.f32 %v450, %v615
    %v648 = vadd.f32 %v451, %v616
    %v649 = vadd.f32 %v452, %v617
    %v650 = vadd.f32 %v453, %v618
    %v651 = vadd.f32 %v454, %v619
    %v652 = vadd.f32 %v455, %v620
    %v653 = vadd.f32 %v456, %v621
    %v654 = vadd.f32 %v457, %v622
    %v655 = vadd.f32 %v458, %v623
    %v656 = vadd.f32 %v459, %v624
    %v657 = vadd.f32 %v460, %v625
    %v658 = vadd.f32 %v461, %v626
    %v659 = vadd.f32 %v462, %v627
    %v660 = vadd.f32 %v463, %v628
    %v661 = vadd.f32 %v464, %v629
    %v662 = vadd.f32 %v465, %v630
    %v663 = vadd.f32 %v466, %v631
    %v664 = vadd.f32 %v467, %v632
    %v665 = vadd.f32 %v468, %v633
    %v666 = vadd.f32 %v469, %v634
    %v667 = vadd.f32 %v470, %v635
    %v668 = vadd.f32 %v471, %v636
    %v669 = vadd.f32 %v472, %v637
    %v670 = vadd.f32 %v473, %v638
    %v671 = vadd.f32 %v474, %v639
    %v672 = vadd.f32 %v475, %v640
    %v673 = vadd.f32 %v476, %v641
    %v674 = vadd.f32 %v477, %v642
    %v675 = vadd.f32 %v478, %v643
    %v676 = vmax.f32 %v644, 0.0
    %v677 = vmax.f32 %v645, 0.0
    %v678 = vmax.f32 %v646, 0.0
    %v679 = vmax.f32 %v647, 0.0
    %v680 = vmax.f32 %v648, 0.0
    %v681 = vmax.f32 %v649, 0.0
    %v682 = vmax.f32 %v650, 0.0
    %v683 = vmax.f32 %v651, 0.0
    %v684 = vmax.f32 %v652, 0.0
    %v685 = vmax.f32 %v653, 0.0
    %v686 = vmax.f32 %v654, 0.0
    %v687 = vmax.f32 %v655, 0.0
    %v688 = vmax.f32 %v656, 0.0
    %v689 = vmax.f32 %v657, 0.0
    %v690 = vmax.f32 %v658, 0.0
    %v691 = vmax.f32 %v659, 0.0
    %v692 = vmax.f32 %v660, 0.0
    %v693 = vmax.f32 %v661, 0.0
    %v694 = vmax.f32 %v662, 0.0
    %v695 = vmax.f32 %v663, 0.0
    %v696 = vmax.f32 %v664, 0.0
    %v697 = vmax.f32 %v665, 0.0
    %v698 = vmax.f32 %v666, 0.0
    %v699 = vmax.f32 %v667, 0.0
    %v700 = vmax.f32 %v668, 0.0
    %v701 = vmax.f32 %v669, 0.0
    %v702 = vmax.f32 %v670, 0.0
    %v703 = vmax.f32 %v671, 0.0
    %v704 = vmax.f32 %v672, 0.0
    %v705 = vmax.f32 %v673, 0.0
    %v706 = vmax.f32 %v674, 0.0
    %v707 = vmax.f32 %v675, 0.0
    %v708 = vpack.c.bf16 %v677, %v676
    %v709 = vpack.c.bf16 %v679, %v678
    %v710 = vpack.c.bf16 %v681, %v680
    %v711 = vpack.c.bf16 %v683, %v682
    %v712 = vpack.c.bf16 %v685, %v684
    %v713 = vpack.c.bf16 %v687, %v686
    %v714 = vpack.c.bf16 %v689, %v688
    %v715 = vpack.c.bf16 %v691, %v690
    %v716 = vpack.c.bf16 %v693, %v692
    %v717 = vpack.c.bf16 %v695, %v694
    %v718 = vpack.c.bf16 %v697, %v696
    %v719 = vpack.c.bf16 %v699, %v698
    %v720 = vpack.c.bf16 %v701, %v700
    %v721 = vpack.c.bf16 %v703, %v702
    %v722 = vpack.c.bf16 %v705, %v704
    %v723 = vpack.c.bf16 %v707, %v706
    %v724 = vld [vmem:[%s2] sm:$0xf]
    %v725 = vld [vmem:[%s2 + $0x4] sm:$0xf]
    %v726 = vld [vmem:[%s2 + $0x8] sm:$0xf]
    %v727 = vld [vmem:[%s2 + $0xc] sm:$0xf]
    %v728 = vld [vmem:[%s2 + $0x10] sm:$0xf]
    %v729 = vld [vmem:[%s2 + $0x14] sm:$0xf]
    %v730 = vld [vmem:[%s2 + $0x18] sm:$0xf]
    %v731 = vld [vmem:[%s2 + $0x1c] sm:$0xf]
    %v732 = vld [vmem:[%s2 + $0x20] sm:$0xf]
    %v733 = vld [vmem:[%s2 + $0x24] sm:$0xf]
    %v734 = vld [vmem:[%s2 + $0x28] sm:$0xf]
    %v735 = vld [vmem:[%s2 + $0x2c] sm:$0xf]
    %v736 = vld [vmem:[%s2 + $0x30] sm:$0xf]
    %v737 = vld [vmem:[%s2 + $0x34] sm:$0xf]
    %v738 = vld [vmem:[%s2 + $0x38] sm:$0xf]
    %v739 = vld [vmem:[%s2 + $0x3c] sm:$0xf]
    %v740 = vld [vmem:[%s1 + $0x4] sm:$0x1]
    %v741 = vlaneseq
    %v742 = vshrl.u32 %v741, 7
    %v743 = vsub.s32 0, %v742
    %v744 = vrot.slane %v740, %v743
    %v761 = vunpack.c.l.b16 %v724
    %v762 = vunpack.c.l.b16 %v725
    %v763 = vunpack.c.l.b16 %v726
    %v764 = vunpack.c.l.b16 %v727
    %v765 = vunpack.c.l.b16 %v728
    %v766 = vunpack.c.l.b16 %v729
    %v767 = vunpack.c.l.b16 %v730
    %v768 = vunpack.c.l.b16 %v731
    %v769 = vunpack.c.l.b16 %v732
    %v770 = vunpack.c.l.b16 %v733
    %v771 = vunpack.c.l.b16 %v734
    %v772 = vunpack.c.l.b16 %v735
    %v773 = vunpack.c.l.b16 %v736
    %v774 = vunpack.c.l.b16 %v737
    %v775 = vunpack.c.l.b16 %v738
    %v776 = vunpack.c.l.b16 %v739
    %v777 = vpack.c.b16 %v762, %v761
    %v778 = vpack.c.b16 %v764, %v763
    %v779 = vpack.c.b16 %v766, %v765
    %v780 = vpack.c.b16 %v768, %v767
    %v781 = vpack.c.b16 %v770, %v769
    %v782 = vpack.c.b16 %v772, %v771
    %v783 = vpack.c.b16 %v774, %v773
    %v784 = vpack.c.b16 %v776, %v775
    %793 = vmatprep.subr.bf16.mxu0 0
    %794 = vmatpush1.bf16.msra.mxu0 %v777
    %795 = vmatprep.subr.bf16.mxu0 0
    %796 = vmatpush1.bf16.msra.mxu0 %v778
    %797 = vmatprep.subr.bf16.mxu0 0
    %798 = vmatpush1.bf16.msra.mxu0 %v779
    %799 = vmatprep.subr.bf16.mxu0 0
    %800 = vmatpush1.bf16.msra.mxu0 %v780
    %801 = vmatprep.subr.bf16.mxu0 0
    %802 = vmatpush1.bf16.msra.mxu0 %v781
    %803 = vmatprep.subr.bf16.mxu0 0
    %804 = vmatpush1.bf16.msra.mxu0 %v782
    %805 = vmatprep.subr.bf16.mxu0 0
    %806 = vmatpush1.bf16.msra.mxu0 %v783
    %807 = vmatprep.subr.bf16.mxu0 0
    %808 = vmatpush1.bf16.msra.mxu0 %v784
    %809 = vmatprep.subr.bf16.mxu0 0
    %810 = vmatpush1.bf16.msra.mxu0 0
    %811 = vmatprep.subr.bf16.mxu0 0
    %812 = vmatpush1.bf16.msra.mxu0 0
    %813 = vmatprep.subr.bf16.mxu0 0
    %814 = vmatpush1.bf16.msra.mxu0 0
    %815 = vmatprep.subr.bf16.mxu0 0
    %816 = vmatpush1.bf16.msra.mxu0 0
    %817 = vmatprep.subr.bf16.mxu0 0
    %818 = vmatpush1.bf16.msra.mxu0 0
    %819 = vmatprep.subr.bf16.mxu0 0
    %820 = vmatpush1.bf16.msra.mxu0 0
    %821 = vmatprep.subr.bf16.mxu0 0
    %822 = vmatpush1.bf16.msra.mxu0 0
    %823 = vmatprep.subr.bf16.mxu0 0
    %824 = vmatpush1.bf16.msra.mxu0 0
    %825 = vmatprep.mubr.bf16.mxu0 0
    %826 = vmatmul.mubr.bf16.gmra.mrb[0].mxu0 %v708
    %v827 = vpop.f32.mrb[0].mxu0
    %v828 = vadd.f32 %v744, %v827
    %v829 = vpop.f32.mrb[0].mxu0
    %v830 = vpop.f32.mrb[0].mxu0
    %v831 = vadd.f32 %v744, %v830
    %v832 = vpop.f32.mrb[0].mxu0
    %833 = vmatprep.mubr.bf16.mxu0 0
    %834 = vmatmul.mubr.bf16.gmra.mrb[0].mxu0 %v709
    %v835 = vpop.f32.mrb[0].mxu0
    %v836 = vadd.f32 %v744, %v835
    %v837 = vpop.f32.mrb[0].mxu0
    %v838 = vpop.f32.mrb[0].mxu0
    %v839 = vadd.f32 %v744, %v838
    %v840 = vpop.f32.mrb[0].mxu0
    %841 = vmatprep.mubr.bf16.mxu0 0
    %842 = vmatmul.mubr.bf16.gmra.mrb[0].mxu0 %v710
    %v843 = vpop.f32.mrb[0].mxu0
    %v844 = vadd.f32 %v744, %v843
    %v845 = vpop.f32.mrb[0].mxu0
    %v846 = vpop.f32.mrb[0].mxu0
    %v847 = vadd.f32 %v744, %v846
    %v848 = vpop.f32.mrb[0].mxu0
    %849 = vmatprep.mubr.bf16.mxu0 0
    %850 = vmatmul.mubr.bf16.gmra.mrb[0].mxu0 %v711
    %v851 = vpop.f32.mrb[0].mxu0
    %v852 = vadd.f32 %v744, %v851
    %v853 = vpop.f32.mrb[0].mxu0
    %v854 = vpop.f32.mrb[0].mxu0
    %v855 = vadd.f32 %v744, %v854
    %v856 = vpop.f32.mrb[0].mxu0
    %857 = vmatprep.mubr.bf16.mxu0 0
    %858 = vmatmul.mubr.bf16.gmra.mrb[0].mxu0 %v712
    %v859 = vpop.f32.mrb[0].mxu0
    %v860 = vadd.f32 %v744, %v859
    %v861 = vpop.f32.mrb[0].mxu0
    %v862 = vpop.f32.mrb[0].mxu0
    %v863 = vadd.f32 %v744, %v862
    %v864 = vpop.f32.mrb[0].mxu0
    %865 = vmatprep.mubr.bf16.mxu0 0
    %866 = vmatmul.mubr.bf16.gmra.mrb[0].mxu0 %v713
    %v867 = vpop.f32.mrb[0].mxu0
    %v868 = vadd.f32 %v744, %v867
    %v869 = vpop.f32.mrb[0].mxu0
    %v870 = vpop.f32.mrb[0].mxu0
    %v871 = vadd.f32 %v744, %v870
    %v872 = vpop.f32.mrb[0].mxu0
    %873 = vmatprep.mubr.bf16.mxu0 0
    %874 = vmatmul.mubr.bf16.gmra.mrb[0].mxu0 %v714
    %v875 = vpop.f32.mrb[0].mxu0
    %v876 = vadd.f32 %v744, %v875
    %v877 = vpop.f32.mrb[0].mxu0
    %v878 = vpop.f32.mrb[0].mxu0
    %v879 = vadd.f32 %v744, %v878
    %v880 = vpop.f32.mrb[0].mxu0
    %881 = vmatprep.mubr.bf16.mxu0 0
    %882 = vmatmul.mubr.bf16.gmra.mrb[0].mxu0 %v715
    %v883 = vpop.f32.mrb[0].mxu0
    %v884 = vadd.f32 %v744, %v883
    %v885 = vpop.f32.mrb[0].mxu0
    %v886 = vpop.f32.mrb[0].mxu0
    %v887 = vadd.f32 %v744, %v886
    %v888 = vpop.f32.mrb[0].mxu0
    %889 = vmatprep.mubr.bf16.mxu0 0
    %890 = vmatmul.mubr.bf16.gmra.mrb[0].mxu0 %v716
    %v891 = vpop.f32.mrb[0].mxu0
    %v892 = vadd.f32 %v744, %v891
    %v893 = vpop.f32.mrb[0].mxu0
    %v894 = vpop.f32.mrb[0].mxu0
    %v895 = vadd.f32 %v744, %v894
    %v896 = vpop.f32.mrb[0].mxu0
    %897 = vmatprep.mubr.bf16.mxu0 0
    %898 = vmatmul.mubr.bf16.gmra.mrb[0].mxu0 %v717
    %v899 = vpop.f32.mrb[0].mxu0
    %v900 = vadd.f32 %v744, %v899
    %v901 = vpop.f32.mrb[0].mxu0
    %v902 = vpop.f32.mrb[0].mxu0
    %v903 = vadd.f32 %v744, %v902
    %v904 = vpop.f32.mrb[0].mxu0
    %905 = vmatprep.mubr.bf16.mxu0 0
    %906 = vmatmul.mubr.bf16.gmra.mrb[0].mxu0 %v718
    %v907 = vpop.f32.mrb[0].mxu0
    %v908 = vadd.f32 %v744, %v907
    %v909 = vpop.f32.mrb[0].mxu0
    %v910 = vpop.f32.mrb[0].mxu0
    %v911 = vadd.f32 %v744, %v910
    %v912 = vpop.f32.mrb[0].mxu0
    %913 = vmatprep.mubr.bf16.mxu0 0
    %914 = vmatmul.mubr.bf16.gmra.mrb[0].mxu0 %v719
    %v915 = vpop.f32.mrb[0].mxu0
    %v916 = vadd.f32 %v744, %v915
    %v917 = vpop.f32.mrb[0].mxu0
    %v918 = vpop.f32.mrb[0].mxu0
    %v919 = vadd.f32 %v744, %v918
    %v920 = vpop.f32.mrb[0].mxu0
    %921 = vmatprep.mubr.bf16.mxu0 0
    %922 = vmatmul.mubr.bf16.gmra.mrb[0].mxu0 %v720
    %v923 = vpop.f32.mrb[0].mxu0
    %v924 = vadd.f32 %v744, %v923
    %v925 = vpop.f32.mrb[0].mxu0
    %v926 = vpop.f32.mrb[0].mxu0
    %v927 = vadd.f32 %v744, %v926
    %v928 = vpop.f32.mrb[0].mxu0
    %929 = vmatprep.mubr.bf16.mxu0 0
    %930 = vmatmul.mubr.bf16.gmra.mrb[0].mxu0 %v721
    %v931 = vpop.f32.mrb[0].mxu0
    %v932 = vadd.f32 %v744, %v931
    %v933 = vpop.f32.mrb[0].mxu0
    %v934 = vpop.f32.mrb[0].mxu0
    %v935 = vadd.f32 %v744, %v934
    %v936 = vpop.f32.mrb[0].mxu0
    %937 = vmatprep.mubr.bf16.mxu0 0
    %938 = vmatmul.mubr.bf16.gmra.mrb[0].mxu0 %v722
    %v939 = vpop.f32.mrb[0].mxu0
    %v940 = vadd.f32 %v744, %v939
    %v941 = vpop.f32.mrb[0].mxu0
    %v942 = vpop.f32.mrb[0].mxu0
    %v943 = vadd.f32 %v744, %v942
    %v944 = vpop.f32.mrb[0].mxu0
    %945 = vmatprep.mubr.bf16.mxu0 0
    %946 = vmatmul.mubr.bf16.gmra.mrb[0].mxu0 %v723
    %v947 = vpop.f32.mrb[0].mxu0
    %v948 = vadd.f32 %v744, %v947
    %v949 = vpop.f32.mrb[0].mxu0
    %v950 = vpop.f32.mrb[0].mxu0
    %v951 = vadd.f32 %v744, %v950
    %v952 = vpop.f32.mrb[0].mxu0
    %953 = vdwg.mxu0
    %v954 = vmax.f32 %v828, 0.0
    %v955 = vmax.f32 %v831, 0.0
    %v956 = vmax.f32 %v836, 0.0
    %v957 = vmax.f32 %v839, 0.0
    %v958 = vmax.f32 %v844, 0.0
    %v959 = vmax.f32 %v847, 0.0
    %v960 = vmax.f32 %v852, 0.0
    %v961 = vmax.f32 %v855, 0.0
    %v962 = vmax.f32 %v860, 0.0
    %v963 = vmax.f32 %v863, 0.0
    %v964 = vmax.f32 %v868, 0.0
    %v965 = vmax.f32 %v871, 0.0
    %v966 = vmax.f32 %v876, 0.0
    %v967 = vmax.f32 %v879, 0.0
    %v968 = vmax.f32 %v884, 0.0
    %v969 = vmax.f32 %v887, 0.0
    %v970 = vmax.f32 %v892, 0.0
    %v971 = vmax.f32 %v895, 0.0
    %v972 = vmax.f32 %v900, 0.0
    %v973 = vmax.f32 %v903, 0.0
    %v974 = vmax.f32 %v908, 0.0
    %v975 = vmax.f32 %v911, 0.0
    %v976 = vmax.f32 %v916, 0.0
    %v977 = vmax.f32 %v919, 0.0
    %v978 = vmax.f32 %v924, 0.0
    %v979 = vmax.f32 %v927, 0.0
    %v980 = vmax.f32 %v932, 0.0
    %v981 = vmax.f32 %v935, 0.0
    %v982 = vmax.f32 %v940, 0.0
    %v983 = vmax.f32 %v943, 0.0
    %v984 = vmax.f32 %v948, 0.0
    %v985 = vmax.f32 %v951, 0.0
    %v986 = vpack.c.bf16 %v955, %v954
    %v987 = vpack.c.bf16 %v957, %v956
    %v988 = vpack.c.bf16 %v959, %v958
    %v989 = vpack.c.bf16 %v961, %v960
    %v990 = vpack.c.bf16 %v963, %v962
    %v991 = vpack.c.bf16 %v965, %v964
    %v992 = vpack.c.bf16 %v967, %v966
    %v993 = vpack.c.bf16 %v969, %v968
    %v994 = vpack.c.bf16 %v971, %v970
    %v995 = vpack.c.bf16 %v973, %v972
    %v996 = vpack.c.bf16 %v975, %v974
    %v997 = vpack.c.bf16 %v977, %v976
    %v998 = vpack.c.bf16 %v979, %v978
    %v999 = vpack.c.bf16 %v981, %v980
    %v1000 = vpack.c.bf16 %v983, %v982
    %v1001 = vpack.c.bf16 %v985, %v984
    %v1002 = vld [vmem:[%s2 + $0x40] sm:$0xf]
    %v1003 = vld [vmem:[%s2 + $0x44] sm:$0xf]
    %v1004 = vld [vmem:[%s2 + $0x48] sm:$0xf]
    %v1005 = vld [vmem:[%s2 + $0x4c] sm:$0xf]
    %v1006 = vld [vmem:[%s2 + $0x50] sm:$0xf]
    %v1007 = vld [vmem:[%s2 + $0x54] sm:$0xf]
    %v1008 = vld [vmem:[%s2 + $0x58] sm:$0xf]
    %v1009 = vld [vmem:[%s2 + $0x5c] sm:$0xf]
    %v1010 = vld [vmem:[%s2 + $0x60] sm:$0xf]
    %v1011 = vld [vmem:[%s2 + $0x64] sm:$0xf]
    %v1012 = vld [vmem:[%s2 + $0x68] sm:$0xf]
    %v1013 = vld [vmem:[%s2 + $0x6c] sm:$0xf]
    %v1014 = vld [vmem:[%s2 + $0x70] sm:$0xf]
    %v1015 = vld [vmem:[%s2 + $0x74] sm:$0xf]
    %v1016 = vld [vmem:[%s2 + $0x78] sm:$0xf]
    %v1017 = vld [vmem:[%s2 + $0x7c] sm:$0xf]
    %v1018 = vld [vmem:[%s1 + $0x5] sm:$0x1]
    %v1019 = vlaneseq
    %v1020 = vshrl.u32 %v1019, 7
    %v1021 = vsub.s32 0, %v1020
    %v1022 = vrot.slane %v1018, %v1021
    %v1039 = vunpack.c.l.b16 %v1002
    %v1040 = vunpack.c.l.b16 %v1003
    %v1041 = vunpack.c.l.b16 %v1004
    %v1042 = vunpack.c.l.b16 %v1005
    %v1043 = vunpack.c.l.b16 %v1006
    %v1044 = vunpack.c.l.b16 %v1007
    %v1045 = vunpack.c.l.b16 %v1008
    %v1046 = vunpack.c.l.b16 %v1009
    %v1047 = vunpack.c.l.b16 %v1010
    %v1048 = vunpack.c.l.b16 %v1011
    %v1049 = vunpack.c.l.b16 %v1012
    %v1050 = vunpack.c.l.b16 %v1013
    %v1051 = vunpack.c.l.b16 %v1014
    %v1052 = vunpack.c.l.b16 %v1015
    %v1053 = vunpack.c.l.b16 %v1016
    %v1054 = vunpack.c.l.b16 %v1017
    %v1055 = vpack.c.b16 %v1040, %v1039
    %v1056 = vpack.c.b16 %v1042, %v1041
    %v1057 = vpack.c.b16 %v1044, %v1043
    %v1058 = vpack.c.b16 %v1046, %v1045
    %v1059 = vpack.c.b16 %v1048, %v1047
    %v1060 = vpack.c.b16 %v1050, %v1049
    %v1061 = vpack.c.b16 %v1052, %v1051
    %v1062 = vpack.c.b16 %v1054, %v1053
    %1071 = vmatprep.subr.bf16.mxu0 0
    %1072 = vmatpush1.bf16.msra.mxu0 %v1055
    %1073 = vmatprep.subr.bf16.mxu0 0
    %1074 = vmatpush1.bf16.msra.mxu0 %v1056
    %1075 = vmatprep.subr.bf16.mxu0 0
    %1076 = vmatpush1.bf16.msra.mxu0 %v1057
    %1077 = vmatprep.subr.bf16.mxu0 0
    %1078 = vmatpush1.bf16.msra.mxu0 %v1058
    %1079 = vmatprep.subr.bf16.mxu0 0
    %1080 = vmatpush1.bf16.msra.mxu0 %v1059
    %1081 = vmatprep.subr.bf16.mxu0 0
    %1082 = vmatpush1.bf16.msra.mxu0 %v1060
    %1083 = vmatprep.subr.bf16.mxu0 0
    %1084 = vmatpush1.bf16.msra.mxu0 %v1061
    %1085 = vmatprep.subr.bf16.mxu0 0
    %1086 = vmatpush1.bf16.msra.mxu0 %v1062
    %1087 = vmatprep.subr.bf16.mxu0 0
    %1088 = vmatpush1.bf16.msra.mxu0 0
    %1089 = vmatprep.subr.bf16.mxu0 0
    %1090 = vmatpush1.bf16.msra.mxu0 0
    %1091 = vmatprep.subr.bf16.mxu0 0
    %1092 = vmatpush1.bf16.msra.mxu0 0
    %1093 = vmatprep.subr.bf16.mxu0 0
    %1094 = vmatpush1.bf16.msra.mxu0 0
    %1095 = vmatprep.subr.bf16.mxu0 0
    %1096 = vmatpush1.bf16.msra.mxu0 0
    %1097 = vmatprep.subr.bf16.mxu0 0
    %1098 = vmatpush1.bf16.msra.mxu0 0
    %1099 = vmatprep.subr.bf16.mxu0 0
    %1100 = vmatpush1.bf16.msra.mxu0 0
    %1101 = vmatprep.subr.bf16.mxu0 0
    %1102 = vmatpush1.bf16.msra.mxu0 0
    %1103 = vmatprep.mubr.bf16.mxu0 0
    %1104 = vmatmul.mubr.bf16.gmra.mrb[0].mxu0 %v986
    %v1105 = vpop.f32.mrb[0].mxu0
    %v1106 = vadd.f32 %v1022, %v1105
    %v1107 = vpop.f32.mrb[0].mxu0
    %v1108 = vpop.f32.mrb[0].mxu0
    %v1109 = vadd.f32 %v1022, %v1108
    %v1110 = vpop.f32.mrb[0].mxu0
    %1111 = vmatprep.mubr.bf16.mxu0 0
    %1112 = vmatmul.mubr.bf16.gmra.mrb[0].mxu0 %v987
    %v1113 = vpop.f32.mrb[0].mxu0
    %v1114 = vadd.f32 %v1022, %v1113
    %v1115 = vpop.f32.mrb[0].mxu0
    %v1116 = vpop.f32.mrb[0].mxu0
    %v1117 = vadd.f32 %v1022, %v1116
    %v1118 = vpop.f32.mrb[0].mxu0
    %1119 = vmatprep.mubr.bf16.mxu0 0
    %1120 = vmatmul.mubr.bf16.gmra.mrb[0].mxu0 %v988
    %v1121 = vpop.f32.mrb[0].mxu0
    %v1122 = vadd.f32 %v1022, %v1121
    %v1123 = vpop.f32.mrb[0].mxu0
    %v1124 = vpop.f32.mrb[0].mxu0
    %v1125 = vadd.f32 %v1022, %v1124
    %v1126 = vpop.f32.mrb[0].mxu0
    %1127 = vmatprep.mubr.bf16.mxu0 0
    %1128 = vmatmul.mubr.bf16.gmra.mrb[0].mxu0 %v989
    %v1129 = vpop.f32.mrb[0].mxu0
    %v1130 = vadd.f32 %v1022, %v1129
    %v1131 = vpop.f32.mrb[0].mxu0
    %v1132 = vpop.f32.mrb[0].mxu0
    %v1133 = vadd.f32 %v1022, %v1132
    %v1134 = vpop.f32.mrb[0].mxu0
    %1135 = vmatprep.mubr.bf16.mxu0 0
    %1136 = vmatmul.mubr.bf16.gmra.mrb[0].mxu0 %v990
    %v1137 = vpop.f32.mrb[0].mxu0
    %v1138 = vadd.f32 %v1022, %v1137
    %v1139 = vpop.f32.mrb[0].mxu0
    %v1140 = vpop.f32.mrb[0].mxu0
    %v1141 = vadd.f32 %v1022, %v1140
    %v1142 = vpop.f32.mrb[0].mxu0
    %1143 = vmatprep.mubr.bf16.mxu0 0
    %1144 = vmatmul.mubr.bf16.gmra.mrb[0].mxu0 %v991
    %v1145 = vpop.f32.mrb[0].mxu0
    %v1146 = vadd.f32 %v1022, %v1145
    %v1147 = vpop.f32.mrb[0].mxu0
    %v1148 = vpop.f32.mrb[0].mxu0
    %v1149 = vadd.f32 %v1022, %v1148
    %v1150 = vpop.f32.mrb[0].mxu0
    %1151 = vmatprep.mubr.bf16.mxu0 0
    %1152 = vmatmul.mubr.bf16.gmra.mrb[0].mxu0 %v992
    %v1153 = vpop.f32.mrb[0].mxu0
    %v1154 = vadd.f32 %v1022, %v1153
    %v1155 = vpop.f32.mrb[0].mxu0
    %v1156 = vpop.f32.mrb[0].mxu0
    %v1157 = vadd.f32 %v1022, %v1156
    %v1158 = vpop.f32.mrb[0].mxu0
    %1159 = vmatprep.mubr.bf16.mxu0 0
    %1160 = vmatmul.mubr.bf16.gmra.mrb[0].mxu0 %v993
    %v1161 = vpop.f32.mrb[0].mxu0
    %v1162 = vadd.f32 %v1022, %v1161
    %v1163 = vpop.f32.mrb[0].mxu0
    %v1164 = vpop.f32.mrb[0].mxu0
    %v1165 = vadd.f32 %v1022, %v1164
    %v1166 = vpop.f32.mrb[0].mxu0
    %1167 = vmatprep.mubr.bf16.mxu0 0
    %1168 = vmatmul.mubr.bf16.gmra.mrb[0].mxu0 %v994
    %v1169 = vpop.f32.mrb[0].mxu0
    %v1170 = vadd.f32 %v1022, %v1169
    %v1171 = vpop.f32.mrb[0].mxu0
    %v1172 = vpop.f32.mrb[0].mxu0
    %v1173 = vadd.f32 %v1022, %v1172
    %v1174 = vpop.f32.mrb[0].mxu0
    %1175 = vmatprep.mubr.bf16.mxu0 0
    %1176 = vmatmul.mubr.bf16.gmra.mrb[0].mxu0 %v995
    %v1177 = vpop.f32.mrb[0].mxu0
    %v1178 = vadd.f32 %v1022, %v1177
    %v1179 = vpop.f32.mrb[0].mxu0
    %v1180 = vpop.f32.mrb[0].mxu0
    %v1181 = vadd.f32 %v1022, %v1180
    %v1182 = vpop.f32.mrb[0].mxu0
    %1183 = vmatprep.mubr.bf16.mxu0 0
    %1184 = vmatmul.mubr.bf16.gmra.mrb[0].mxu0 %v996
    %v1185 = vpop.f32.mrb[0].mxu0
    %v1186 = vadd.f32 %v1022, %v1185
    %v1187 = vpop.f32.mrb[0].mxu0
    %v1188 = vpop.f32.mrb[0].mxu0
    %v1189 = vadd.f32 %v1022, %v1188
    %v1190 = vpop.f32.mrb[0].mxu0
    %1191 = vmatprep.mubr.bf16.mxu0 0
    %1192 = vmatmul.mubr.bf16.gmra.mrb[0].mxu0 %v997
    %v1193 = vpop.f32.mrb[0].mxu0
    %v1194 = vadd.f32 %v1022, %v1193
    %v1195 = vpop.f32.mrb[0].mxu0
    %v1196 = vpop.f32.mrb[0].mxu0
    %v1197 = vadd.f32 %v1022, %v1196
    %v1198 = vpop.f32.mrb[0].mxu0
    %1199 = vmatprep.mubr.bf16.mxu0 0
    %1200 = vmatmul.mubr.bf16.gmra.mrb[0].mxu0 %v998
    %v1201 = vpop.f32.mrb[0].mxu0
    %v1202 = vadd.f32 %v1022, %v1201
    %v1203 = vpop.f32.mrb[0].mxu0
    %v1204 = vpop.f32.mrb[0].mxu0
    %v1205 = vadd.f32 %v1022, %v1204
    %v1206 = vpop.f32.mrb[0].mxu0
    %1207 = vmatprep.mubr.bf16.mxu0 0
    %1208 = vmatmul.mubr.bf16.gmra.mrb[0].mxu0 %v999
    %v1209 = vpop.f32.mrb[0].mxu0
    %v1210 = vadd.f32 %v1022, %v1209
    %v1211 = vpop.f32.mrb[0].mxu0
    %v1212 = vpop.f32.mrb[0].mxu0
    %v1213 = vadd.f32 %v1022, %v1212
    %v1214 = vpop.f32.mrb[0].mxu0
    %1215 = vmatprep.mubr.bf16.mxu0 0
    %1216 = vmatmul.mubr.bf16.gmra.mrb[0].mxu0 %v1000
    %v1217 = vpop.f32.mrb[0].mxu0
    %v1218 = vadd.f32 %v1022, %v1217
    %v1219 = vpop.f32.mrb[0].mxu0
    %v1220 = vpop.f32.mrb[0].mxu0
    %v1221 = vadd.f32 %v1022, %v1220
    %v1222 = vpop.f32.mrb[0].mxu0
    %1223 = vmatprep.mubr.bf16.mxu0 0
    %1224 = vmatmul.mubr.bf16.gmra.mrb[0].mxu0 %v1001
    %v1225 = vpop.f32.mrb[0].mxu0
    %v1226 = vadd.f32 %v1022, %v1225
    %v1227 = vpop.f32.mrb[0].mxu0
    %v1228 = vpop.f32.mrb[0].mxu0
    %v1229 = vadd.f32 %v1022, %v1228
    %v1230 = vpop.f32.mrb[0].mxu0
    %1231 = vdwg.mxu0
    %1232 = vst [vmem:[#allocation2] sm:$0xff] %v1106
    %1233 = vst [vmem:[#allocation2 + $0x8] sm:$0xff] %v1109
    %1234 = vst [vmem:[#allocation2 + $0x10] sm:$0xff] %v1114
    %1235 = vst [vmem:[#allocation2 + $0x18] sm:$0xff] %v1117
    %1236 = vst [vmem:[#allocation2 + $0x20] sm:$0xff] %v1122
    %1237 = vst [vmem:[#allocation2 + $0x28] sm:$0xff] %v1125
    %1238 = vst [vmem:[#allocation2 + $0x30] sm:$0xff] %v1130
    %1239 = vst [vmem:[#allocation2 + $0x38] sm:$0xff] %v1133
    %1240 = vst [vmem:[#allocation2 + $0x40] sm:$0xff] %v1138
    %1241 = vst [vmem:[#allocation2 + $0x48] sm:$0xff] %v1141
    %1242 = vst [vmem:[#allocation2 + $0x50] sm:$0xff] %v1146
    %1243 = vst [vmem:[#allocation2 + $0x58] sm:$0xff] %v1149
    %1244 = vst [vmem:[#allocation2 + $0x60] sm:$0xff] %v1154
    %1245 = vst [vmem:[#allocation2 + $0x68] sm:$0xff] %v1157
    %1246 = vst [vmem:[#allocation2 + $0x70] sm:$0xff] %v1162
    %1247 = vst [vmem:[#allocation2 + $0x78] sm:$0xff] %v1165
    %1248 = vst [vmem:[#allocation2 + $0x80] sm:$0xff] %v1170
    %1249 = vst [vmem:[#allocation2 + $0x88] sm:$0xff] %v1173
    %1250 = vst [vmem:[#allocation2 + $0x90] sm:$0xff] %v1178
    %1251 = vst [vmem:[#allocation2 + $0x98] sm:$0xff] %v1181
    %1252 = vst [vmem:[#allocation2 + $0xa0] sm:$0xff] %v1186
    %1253 = vst [vmem:[#allocation2 + $0xa8] sm:$0xff] %v1189
    %1254 = vst [vmem:[#allocation2 + $0xb0] sm:$0xff] %v1194
    %1255 = vst [vmem:[#allocation2 + $0xb8] sm:$0xff] %v1197
    %1256 = vst [vmem:[#allocation2 + $0xc0] sm:$0xff] %v1202
    %1257 = vst [vmem:[#allocation2 + $0xc8] sm:$0xff] %v1205
    %1258 = vst [vmem:[#allocation2 + $0xd0] sm:$0xff] %v1210
    %1259 = vst [vmem:[#allocation2 + $0xd8] sm:$0xff] %v1213
    %1260 = vst [vmem:[#allocation2 + $0xe0] sm:$0xff] %v1218
    %1261 = vst [vmem:[#allocation2 + $0xe8] sm:$0xff] %v1221
    %1262 = vst [vmem:[#allocation2 + $0xf0] sm:$0xff] %v1226
    %1263 = vst [vmem:[#allocation2 + $0xf8] sm:$0xff] %v1229
    // Predicated region
    $region14: #{tpu_custom_call.1} parent=1 // pred_check
      _
    $region15: #{tpu_custom_call.1} parent=1 // pred_check_branch
      %1265 = sbr.rel (0) target = $region17
    $region16: #{tpu_custom_call.1} parent=1 // pred_region
      %s1267 = ssub.s32 4096, 4096
      %1268 = vsyncadd [#allocation3], %s1267
      %s1269 = sshll.u32 [#allocation2], 4
      %s1270 = int_to_ptr.vmem [resolvable:$true] %s1269
      %1275 = dma.vmem_to_hbm [thread:$0]  %s1270, 4096, %s3, [#allocation3], 128, 128, 8
    $region17: #{tpu_custom_call.1} parent=1 // pred_fallthru
      _
    // Predicated region
    $region18: #{tpu_custom_call.1} parent=1 // pred_check
      _
    $region19: #{tpu_custom_call.1} parent=1 // pred_check_branch
      %1277 = sbr.rel (0) target = $region21
    $region20: #{tpu_custom_call.1} parent=1 // pred_region
      %1278 = dma.done [#allocation3], 4096
    $region21: #{tpu_custom_call.1} parent=1 // pred_fallthru
      _
    %1279 = vsyncpa [#allocation3], 1

</llo_original>
